<compile_context>
chip_gen: v7x
topology: tpu7x:2x2x1
jax: 0.10.0
libtpu: 0.0.40
codegen_flags: <defaults>
</compile_context>

<pallas_src>
import jax
import jax.numpy as jnp
from jax.experimental import pallas as pl
from jax.experimental.pallas import tpu as pltpu


def exciter_net_kernel(x_ref, w1_ref, b1_ref, w2_ref, b2_ref, w3_ref, b3_ref,
                       out_ref):
    """Fused forward: Linear1(+exciter scale/shift folded) -> clamp[-10,10]
    -> Linear2 -> relu -> Linear3.  All weights are lane-packed block-diagonal
    versions (P logical rows per vreg row); the body is shape-agnostic."""
    x = x_ref[...]                                                    # (tbp, P*In)

    h1 = jnp.dot(x, w1_ref[...], preferred_element_type=jnp.float32) + b1_ref[...]

    # ExciterFunction.forward: clamp to [-10, 10].
    # TODO(synk): ExciterLayer.custom_backward / exciter_callback mutate the
    # exciter weights during the backward pass; only the forward is implemented.
    e = jnp.clip(h1, -10.0, 10.0)

    h2 = jnp.dot(e.astype(w2_ref.dtype), w2_ref[...],
                 preferred_element_type=jnp.float32) + b2_ref[...]
    h2 = jnp.maximum(h2, 0.0)

    out = jnp.dot(h2.astype(w3_ref.dtype), w3_ref[...],
                  preferred_element_type=jnp.float32) + b3_ref[...]
    out_ref[...] = out.astype(out_ref.dtype)


def _round_up(x, m):
    return ((x + m - 1) // m) * m


def prepare_params(raw_params, *, pack=8, compute_dtype=jnp.bfloat16):
    """One-time parameter prep.

    * folds the exciter's scale/shift into Linear1 (forward pass only),
    * builds block-diagonal "lane-packed" weights so `pack` logical batch rows
      share one 128-lane vreg row (K/N per matmul grow pack-x),
    * packing is built in f32 and cast to `compute_dtype` once at the end;
      biases stay f32.

    raw_params = (w1, b1, ew, eb, w2, b2, w3, b3); nn.Linear weights already
    stored transposed as (in, out).
    """
    (w1, b1, ew, eb, w2, b2, w3, b3) = [jnp.asarray(p, jnp.float32)
                                        for p in raw_params]
    # Fold exciter: (x@w1 + b1)*ew + eb == x@(w1*ew) + (b1*ew + eb)
    w1f = w1 * ew
    b1f = b1 * ew + eb

    eye = jnp.eye(pack, dtype=jnp.float32)
    bd = lambda w: jnp.kron(eye, w)            # (in, out) -> (pack*in, pack*out)
    tl = lambda b: jnp.tile(b, (1, pack))      # (1, n)    -> (1, pack*n)

    return {
        "pack": pack,
        "in_size": int(w1.shape[0]),
        "out_size": int(w3.shape[1]),
        "w1": bd(w1f).astype(compute_dtype), "b1": tl(b1f),
        "w2": bd(w2).astype(compute_dtype),  "b2": tl(b2),
        "w3": bd(w3).astype(compute_dtype),  "b3": tl(b3),
    }


def _full_spec(arr):
    # Whole (small) array resident every grid step; constant block index.
    return pl.BlockSpec(arr.shape, lambda i: (0, 0))


def simple_network_with_exciter(x, params, *, tb=8192, min_split_rows=512):
    """Batch-tiled fused forward.  `params` comes from prepare_params().

    `tb` is the requested *logical* batch rows per tile (converted to packed
    rows internally); `min_split_rows` gates the even-tile-count split that
    only pays off on dual-TensorCore chips (v7x)."""
    P = params["pack"]
    In, O = params["in_size"], params["out_size"]
    w1, b1 = params["w1"], params["b1"]
    w2, b2 = params["w2"], params["b2"]
    w3, b3 = params["w3"], params["b3"]
    Kp, Ep = w1.shape                       # (P*In, P*E)
    Hp = w2.shape[1]                        # P*H
    Op = w3.shape[1]                        # P*O
    compute_dtype = w1.dtype

    B = x.shape[0]
    assert x.shape[1] == In, (x.shape, In)

    # --- packed-batch tiling ---------------------------------------------
    SUB = 8                                          # packed-row sublane granule
    Bp = _round_up(pl.cdiv(B, P), SUB)               # packed rows (aligned)
    tbp = _round_up(min(max(tb // P, SUB), Bp), SUB) # packed rows per tile
    n_tiles = pl.cdiv(Bp, tbp)
    # v7x: two TensorCores share the ("parallel",) axis -> keep tile count even
    # so both get equal work.  On 1-TC v5e/v6e extra grid steps are pure
    # overhead, so only do this when the batch is big enough to amortize it.
    if B >= min_split_rows and (n_tiles % 2) != 0:
        n_tiles += 1
        tbp = _round_up(pl.cdiv(Bp, n_tiles), SUB)
    Bp_pad = n_tiles * tbp
    B_pad = Bp_pad * P

    # --- lane-pack the input: (B, In) -> (Bp_pad, P*In); free contiguous view.
    xk = x.astype(compute_dtype)
    if B_pad != B:
        xk = jnp.pad(xk, ((0, B_pad - B), (0, 0)))   # padded rows sliced off below
    xk = xk.reshape(Bp_pad, P * In)

    flops = 2 * Bp_pad * (Kp * Ep + Ep * Hp + Hp * Op)
    bytes_accessed = (xk.size * xk.dtype.itemsize
                      + Bp_pad * Op * 4
                      + sum(int(a.size) * a.dtype.itemsize
                            for a in (w1, b1, w2, b2, w3, b3)))

    out_packed = pl.pallas_call(
        exciter_net_kernel,
        out_shape=jax.ShapeDtypeStruct((Bp_pad, Op), jnp.float32),
        grid=(n_tiles,),
        in_specs=[
            pl.BlockSpec((tbp, Kp), lambda i: (i, 0)),   # x, batch-tiled
            _full_spec(w1), _full_spec(b1),              # W1' (exciter folded), b1'
            _full_spec(w2), _full_spec(b2),
            _full_spec(w3), _full_spec(b3),
        ],
        out_specs=pl.BlockSpec((tbp, Op), lambda i: (i, 0)),
        compiler_params=pltpu.CompilerParams(
            dimension_semantics=("parallel",)),
        cost_estimate=pl.CostEstimate(flops=flops, transcendentals=0,
                                      bytes_accessed=bytes_accessed),
    )(xk, w1, b1, w2, b2, w3, b3)

    # Unpack: (Bp_pad, P*O) -> (B_pad, O) -> [:B]; free contiguous view + slice.
    return out_packed.reshape(B_pad, O)[:B]


def init_params(key, input_size, exciter_neurons, hidden_size, output_size):
    """Deterministic synthetic parameters (shapes match the PyTorch __init__)."""
    k1, k2, k3, k4, k5, k6 = jax.random.split(key, 6)
    # nn.Linear(in, out): weight (out, in) -> store transposed as (in, out)
    w1 = jax.random.normal(k1, (input_size, exciter_neurons), jnp.float32) * 0.1
    b1 = jax.random.normal(k2, (1, exciter_neurons), jnp.float32) * 0.1
    # ExciterLayer: weight = ones(n), bias = zeros(n)
    ew = jnp.ones((1, exciter_neurons), jnp.float32)
    eb = jnp.zeros((1, exciter_neurons), jnp.float32)
    w2 = jax.random.normal(k3, (exciter_neurons, hidden_size), jnp.float32) * 0.1
    b2 = jax.random.normal(k4, (1, hidden_size), jnp.float32) * 0.1
    w3 = jax.random.normal(k5, (hidden_size, output_size), jnp.float32) * 0.1
    b3 = jax.random.normal(k6, (1, output_size), jnp.float32) * 0.1
    return (w1, b1, ew, eb, w2, b2, w3, b3)


def reference_forward(x, raw_params):
    (w1, b1, ew, eb, w2, b2, w3, b3) = raw_params
    h1 = x @ w1 + b1
    e = jnp.clip(h1 * ew + eb, -10.0, 10.0)
    h2 = jnp.maximum(e @ w2 + b2, 0.0)
    return h2 @ w3 + b3


if __name__ == "__main__":
    # Small shapes implied by the module: batch x input_size flat vectors.
    batch, input_size, exciter_neurons, hidden_size, output_size = 8, 16, 32, 32, 8

    key = jax.random.PRNGKey(0)
    kx, kp, kx2 = jax.random.split(key, 3)
    x = jax.random.normal(kx, (batch, input_size), jnp.float32)
    raw = init_params(kp, input_size, exciter_neurons, hidden_size, output_size)
    ref = reference_forward(x, raw)

    # 1) f32 compute path on the tiny batch: exact check (block-diagonal packing
    #    with f32 is numerically identical to the unpacked reference).
    p32 = prepare_params(raw, compute_dtype=jnp.float32)
    out32 = jax.block_until_ready(simple_network_with_exciter(x, p32))
    assert out32.shape == (batch, output_size)
    assert jnp.allclose(out32, ref, atol=1e-5, rtol=1e-5)

    # 2) default bf16 compute path on a larger, non-multiple-of-8 batch:
    #    exercises padding, lane packing, and the even-tile (megacore) split.
    big_batch = 1000
    xb = jax.random.normal(kx2, (big_batch, input_size), jnp.float32)
    pbf = prepare_params(raw)                 # bf16 block-diagonal, exciter folded
    outbf = jax.block_until_ready(simple_network_with_exciter(xb, pbf))
    refb = reference_forward(xb, raw)
    assert outbf.shape == (big_batch, output_size)
    assert jnp.allclose(outbf, refb, atol=2e-2, rtol=2e-2)

    print("KERNEL_OK")
</pallas_src>

<mosaic_0001>
module attributes {stable_mosaic.version = 11 : i64} {
  func.func @exciter_net_kernel(%arg0: i32, %arg1: memref<8x128xf32, #tpu.memory_space<vmem>>, %arg2: memref<128x256xf32, #tpu.memory_space<vmem>>, %arg3: memref<1x256xf32, #tpu.memory_space<vmem>>, %arg4: memref<256x256xf32, #tpu.memory_space<vmem>>, %arg5: memref<1x256xf32, #tpu.memory_space<vmem>>, %arg6: memref<256x64xf32, #tpu.memory_space<vmem>>, %arg7: memref<1x64xf32, #tpu.memory_space<vmem>>, %arg8: memref<8x64xf32, #tpu.memory_space<vmem>>) attributes {dimension_semantics = [#tpu.dimension_semantics<parallel>], iteration_bounds = array<i64: 1>, scalar_prefetch = 0 : i64, scratch_operands = 0 : i64, tpu.core_type = #tpu.core_type<tc>, window_params = [{transform_indices = @transform_0, window_bounds = array<i64: 8, 128>}, {pipeline_mode = #tpu.pipeline_mode<synchronous>, transform_indices = @transform_1, window_bounds = array<i64: 128, 256>}, {pipeline_mode = #tpu.pipeline_mode<synchronous>, transform_indices = @transform_2, window_bounds = array<i64: 1, 256>}, {pipeline_mode = #tpu.pipeline_mode<synchronous>, transform_indices = @transform_3, window_bounds = array<i64: 256, 256>}, {pipeline_mode = #tpu.pipeline_mode<synchronous>, transform_indices = @transform_4, window_bounds = array<i64: 1, 256>}, {pipeline_mode = #tpu.pipeline_mode<synchronous>, transform_indices = @transform_5, window_bounds = array<i64: 256, 64>}, {pipeline_mode = #tpu.pipeline_mode<synchronous>, transform_indices = @transform_6, window_bounds = array<i64: 1, 64>}, {transform_indices = @transform_7, window_bounds = array<i64: 8, 64>}]} {
    %c0 = arith.constant 0 : index
    %c0_0 = arith.constant 0 : index
    %0 = vector.load %arg1[%c0, %c0_0] : memref<8x128xf32, #tpu.memory_space<vmem>>, vector<8x128xf32>
    %c0_1 = arith.constant 0 : index
    %c0_2 = arith.constant 0 : index
    %1 = vector.load %arg2[%c0_1, %c0_2] : memref<128x256xf32, #tpu.memory_space<vmem>>, vector<128x256xf32>
    %cst = arith.constant dense<0.000000e+00> : vector<8x256xf32>
    %2 = tpu.matmul %0, %1, %cst {dimension_numbers = #tpu.dot_dimension_numbers<[1], [0], [0], [1], [0, 0, 1, 1], [], []>} : vector<8x128xf32>, vector<128x256xf32>, vector<8x256xf32> -> vector<8x256xf32>
    %c0_3 = arith.constant 0 : index
    %c0_4 = arith.constant 0 : index
    %3 = vector.load %arg3[%c0_3, %c0_4] : memref<1x256xf32, #tpu.memory_space<vmem>>, vector<1x256xf32>
    %4 = vector.broadcast %3 : vector<1x256xf32> to vector<8x256xf32>
    %5 = arith.addf %2, %4 : vector<8x256xf32>
    %cst_5 = arith.constant -1.000000e+01 : f32
    %cst_6 = arith.constant 1.000000e+01 : f32
    %6 = vector.broadcast %cst_5 : f32 to vector<8x256xf32>
    %7 = arith.maximumf %6, %5 : vector<8x256xf32>
    %8 = vector.broadcast %cst_6 : f32 to vector<8x256xf32>
    %9 = arith.minimumf %8, %7 : vector<8x256xf32>
    %c0_7 = arith.constant 0 : index
    %c0_8 = arith.constant 0 : index
    %10 = vector.load %arg4[%c0_7, %c0_8] : memref<256x256xf32, #tpu.memory_space<vmem>>, vector<256x256xf32>
    %cst_9 = arith.constant dense<0.000000e+00> : vector<8x256xf32>
    %11 = tpu.matmul %9, %10, %cst_9 {dimension_numbers = #tpu.dot_dimension_numbers<[1], [0], [0], [1], [0, 0, 1, 1], [], []>} : vector<8x256xf32>, vector<256x256xf32>, vector<8x256xf32> -> vector<8x256xf32>
    %c0_10 = arith.constant 0 : index
    %c0_11 = arith.constant 0 : index
    %12 = vector.load %arg5[%c0_10, %c0_11] : memref<1x256xf32, #tpu.memory_space<vmem>>, vector<1x256xf32>
    %13 = vector.broadcast %12 : vector<1x256xf32> to vector<8x256xf32>
    %14 = arith.addf %11, %13 : vector<8x256xf32>
    %cst_12 = arith.constant 0.000000e+00 : f32
    %15 = vector.broadcast %cst_12 : f32 to vector<8x256xf32>
    %16 = arith.maximumf %14, %15 : vector<8x256xf32>
    %c0_13 = arith.constant 0 : index
    %c0_14 = arith.constant 0 : index
    %17 = vector.load %arg6[%c0_13, %c0_14] : memref<256x64xf32, #tpu.memory_space<vmem>>, vector<256x64xf32>
    %cst_15 = arith.constant dense<0.000000e+00> : vector<8x64xf32>
    %18 = tpu.matmul %16, %17, %cst_15 {dimension_numbers = #tpu.dot_dimension_numbers<[1], [0], [0], [1], [0, 0, 1, 1], [], []>} : vector<8x256xf32>, vector<256x64xf32>, vector<8x64xf32> -> vector<8x64xf32>
    %c0_16 = arith.constant 0 : index
    %c0_17 = arith.constant 0 : index
    %19 = vector.load %arg7[%c0_16, %c0_17] : memref<1x64xf32, #tpu.memory_space<vmem>>, vector<1x64xf32>
    %20 = vector.broadcast %19 : vector<1x64xf32> to vector<8x64xf32>
    %21 = arith.addf %18, %20 : vector<8x64xf32>
    %c0_18 = arith.constant 0 : index
    %c0_19 = arith.constant 0 : index
    %22 = vector.load %arg8[%c0_18, %c0_19] : memref<8x64xf32, #tpu.memory_space<vmem>>, vector<8x64xf32>
    tpu.vector_store %arg8[%c0_18, %c0_19], %21 {strides = array<i32>} : memref<8x64xf32, #tpu.memory_space<vmem>>, vector<8x64xf32>,
    return
  }
  func.func @transform_0(%arg0: i32) -> (i32, i32) {
    %c0_i32 = arith.constant 0 : i32
    %c0_i32_0 = arith.constant 0 : i32
    return %arg0, %c0_i32 : i32, i32
  }
  func.func @transform_1(%arg0: i32) -> (i32, i32) {
    %c0_i32 = arith.constant 0 : i32
    %c0_i32_0 = arith.constant 0 : i32
    %c0_i32_1 = arith.constant 0 : i32
    return %c0_i32, %c0_i32_0 : i32, i32
  }
  func.func @transform_2(%arg0: i32) -> (i32, i32) {
    %c0_i32 = arith.constant 0 : i32
    %c0_i32_0 = arith.constant 0 : i32
    %c0_i32_1 = arith.constant 0 : i32
    return %c0_i32, %c0_i32_0 : i32, i32
  }
  func.func @transform_3(%arg0: i32) -> (i32, i32) {
    %c0_i32 = arith.constant 0 : i32
    %c0_i32_0 = arith.constant 0 : i32
    %c0_i32_1 = arith.constant 0 : i32
    return %c0_i32, %c0_i32_0 : i32, i32
  }
  func.func @transform_4(%arg0: i32) -> (i32, i32) {
    %c0_i32 = arith.constant 0 : i32
    %c0_i32_0 = arith.constant 0 : i32
    %c0_i32_1 = arith.constant 0 : i32
    return %c0_i32, %c0_i32_0 : i32, i32
  }
  func.func @transform_5(%arg0: i32) -> (i32, i32) {
    %c0_i32 = arith.constant 0 : i32
    %c0_i32_0 = arith.constant 0 : i32
    %c0_i32_1 = arith.constant 0 : i32
    return %c0_i32, %c0_i32_0 : i32, i32
  }
  func.func @transform_6(%arg0: i32) -> (i32, i32) {
    %c0_i32 = arith.constant 0 : i32
    %c0_i32_0 = arith.constant 0 : i32
    %c0_i32_1 = arith.constant 0 : i32
    return %c0_i32, %c0_i32_0 : i32, i32
  }
  func.func @transform_7(%arg0: i32) -> (i32, i32) {
    %c0_i32 = arith.constant 0 : i32
    %c0_i32_0 = arith.constant 0 : i32
    return %arg0, %c0_i32 : i32, i32
  }
}

</mosaic_0001>

<llo_original>
// kernel: tpu_custom_call.1
$region0: #{tpu_custom_call.1}
  #allocation0 [shape = 'u32[]', space=smem, size = 0x4, offset = 0x4, fixed_abs, tag = 'smem constant byte address 0x4 - core index']
  #allocation1 [shape = 'u32[144,128]{1,0:T(1,128)}', space=vmem, size = 0x12000, scoped, tag = 'internal scratch']
  %s0 = inlined_call_operand.vmem [shape: f32[8,128], index: 0, kind: input, shape index: {}]
  %s1 = inlined_call_operand.vmem [shape: f32[128,256], index: 1, kind: input, shape index: {}]
  %s2 = inlined_call_operand.vmem [shape: f32[1,256], index: 2, kind: input, shape index: {}]
  %s3 = inlined_call_operand.hbm [shape: f32[256,256], index: 3, kind: input, shape index: {}]
  %s4 = inlined_call_operand.vmem [shape: f32[1,256], index: 4, kind: input, shape index: {}]
  %s5 = inlined_call_operand.vmem [shape: f32[256,64], index: 5, kind: input, shape index: {}]
  %s6 = inlined_call_operand.vmem [shape: f32[1,64], index: 6, kind: input, shape index: {}]
  %s7 = inlined_call_operand.hbm [shape: f32[8,64], index: 7, kind: output, shape index: {}]
  %s8 = sld [smem:[#allocation0]]
  $region42: #{tpu_custom_call.1} parent=0
    _
  %s10 = ssub.s32 1, %s8
  %s11 = scalar_select 0, %s10, %s8
  $region1: #{tpu_custom_call.1} parent=0
    #allocation2 [shape = 'u8[262144]{0}', space=vmem, size = 0x40000, scoped, tag = 'input window, operand 3, single buffered']
    #allocation3 [shape = 's32[1]{0}', space=sflag, size = 0x4, scoped, tag = 'scoped memory for tpu_custom_call.1']
    #allocation4 [shape = 's32[1]{0}', space=sflag, size = 0x4, scoped, tag = 'scoped memory for tpu_custom_call.1']
    #allocation5 [shape = 'u8[4096]{0}', space=vmem, size = 0x1000, scoped, tag = 'output window, operand 0, single buffered']
    %12 = vsyncpa [#allocation3], 0
    %13 = vsyncpa [#allocation4], 0
    // Predicated region
    $region2: #{tpu_custom_call.1} parent=1 // pred_check
      _
    $region3: #{tpu_custom_call.1} parent=1 // pred_check_branch
      %15 = sbr.rel (0) target = $region5
    $region4: #{tpu_custom_call.1} parent=1 // pred_region
      _
    $region5: #{tpu_custom_call.1} parent=1 // pred_fallthru
      _
    // Predicated region
    $region6: #{tpu_custom_call.1} parent=1 // pred_check
      _
    $region7: #{tpu_custom_call.1} parent=1 // pred_check_branch
      %17 = sbr.rel (0) target = $region9
    $region8: #{tpu_custom_call.1} parent=1 // pred_region
      _
    $region9: #{tpu_custom_call.1} parent=1 // pred_fallthru
      _
    // Predicated region
    $region10: #{tpu_custom_call.1} parent=1 // pred_check
      _
    $region11: #{tpu_custom_call.1} parent=1 // pred_check_branch
      %19 = sbr.rel (0) target = $region13
    $region12: #{tpu_custom_call.1} parent=1 // pred_region
      _
    $region13: #{tpu_custom_call.1} parent=1 // pred_fallthru
      _
    // Predicated region
    $region14: #{tpu_custom_call.1} parent=1 // pred_check
      _
    $region15: #{tpu_custom_call.1} parent=1 // pred_check_branch
      %21 = sbr.rel (0) target = $region17
    $region16: #{tpu_custom_call.1} parent=1 // pred_region
      %s23 = ssub.s32 8192, 8192
      %24 = vsyncadd [#allocation3], %s23
      %s25 = sshll.u32 [#allocation2], 4
      %s26 = int_to_ptr.vmem [resolvable:$true] %s25
      %31 = dma.hbm_to_vmem [thread:$0]  %s3, 8192, %s26, [#allocation3], 256, 256, 16
    $region17: #{tpu_custom_call.1} parent=1 // pred_fallthru
      _
    // Predicated region
    $region18: #{tpu_custom_call.1} parent=1 // pred_check
      _
    $region19: #{tpu_custom_call.1} parent=1 // pred_check_branch
      %33 = sbr.rel (0) target = $region21
    $region20: #{tpu_custom_call.1} parent=1 // pred_region
      _
    $region21: #{tpu_custom_call.1} parent=1 // pred_fallthru
      _
    // Predicated region
    $region22: #{tpu_custom_call.1} parent=1 // pred_check
      _
    $region23: #{tpu_custom_call.1} parent=1 // pred_check_branch
      %35 = sbr.rel (0) target = $region25
    $region24: #{tpu_custom_call.1} parent=1 // pred_region
      _
    $region25: #{tpu_custom_call.1} parent=1 // pred_fallthru
      _
    // Predicated region
    $region26: #{tpu_custom_call.1} parent=1 // pred_check
      _
    $region27: #{tpu_custom_call.1} parent=1 // pred_check_branch
      %37 = sbr.rel (0) target = $region29
    $region28: #{tpu_custom_call.1} parent=1 // pred_region
      _
    $region29: #{tpu_custom_call.1} parent=1 // pred_fallthru
      _
    // Predicated region
    $region30: #{tpu_custom_call.1} parent=1 // pred_check
      _
    $region31: #{tpu_custom_call.1} parent=1 // pred_check_branch
      %39 = sbr.rel (0) target = $region33
    $region32: #{tpu_custom_call.1} parent=1 // pred_region
      %40 = dma.done [#allocation3], 8192
    $region33: #{tpu_custom_call.1} parent=1 // pred_fallthru
      _
    %v41 = vld [vmem:[%s0] sm:$0xff]
    %v42 = vld [vmem:[%s1] sm:$0xff]
    %v43 = vld [vmem:[%s1 + $0x8] sm:$0xff]
    %v44 = vld [vmem:[%s1 + $0x10] sm:$0xff]
    %v45 = vld [vmem:[%s1 + $0x18] sm:$0xff]
    %v46 = vld [vmem:[%s1 + $0x20] sm:$0xff]
    %v47 = vld [vmem:[%s1 + $0x28] sm:$0xff]
    %v48 = vld [vmem:[%s1 + $0x30] sm:$0xff]
    %v49 = vld [vmem:[%s1 + $0x38] sm:$0xff]
    %v50 = vld [vmem:[%s1 + $0x40] sm:$0xff]
    %v51 = vld [vmem:[%s1 + $0x48] sm:$0xff]
    %v52 = vld [vmem:[%s1 + $0x50] sm:$0xff]
    %v53 = vld [vmem:[%s1 + $0x58] sm:$0xff]
    %v54 = vld [vmem:[%s1 + $0x60] sm:$0xff]
    %v55 = vld [vmem:[%s1 + $0x68] sm:$0xff]
    %v56 = vld [vmem:[%s1 + $0x70] sm:$0xff]
    %v57 = vld [vmem:[%s1 + $0x78] sm:$0xff]
    %v58 = vld [vmem:[%s1 + $0x80] sm:$0xff]
    %v59 = vld [vmem:[%s1 + $0x88] sm:$0xff]
    %v60 = vld [vmem:[%s1 + $0x90] sm:$0xff]
    %v61 = vld [vmem:[%s1 + $0x98] sm:$0xff]
    %v62 = vld [vmem:[%s1 + $0xa0] sm:$0xff]
    %v63 = vld [vmem:[%s1 + $0xa8] sm:$0xff]
    %v64 = vld [vmem:[%s1 + $0xb0] sm:$0xff]
    %v65 = vld [vmem:[%s1 + $0xb8] sm:$0xff]
    %v66 = vld [vmem:[%s1 + $0xc0] sm:$0xff]
    %v67 = vld [vmem:[%s1 + $0xc8] sm:$0xff]
    %v68 = vld [vmem:[%s1 + $0xd0] sm:$0xff]
    %v69 = vld [vmem:[%s1 + $0xd8] sm:$0xff]
    %v70 = vld [vmem:[%s1 + $0xe0] sm:$0xff]
    %v71 = vld [vmem:[%s1 + $0xe8] sm:$0xff]
    %v72 = vld [vmem:[%s1 + $0xf0] sm:$0xff]
    %v73 = vld [vmem:[%s1 + $0xf8] sm:$0xff]
    %v74 = vld [vmem:[%s2] sm:$0x3]
    %v76 = vlaneseq
    %v77 = vshrl.u32 %v76, 7
    %v78 = vsub.s32 0, %v77
    %v79 = vrot.slane %v74, %v78
    %v80 = vlaneseq
    %v81 = vshrl.u32 %v80, 7
    %v82 = vsub.s32 1, %v81
    %v83 = vrot.slane %v74, %v82
    %86 = vmatprep.subr.mxu0 %v43
    %87 = vmatpush1.msra.mxu0 %v42
    %88 = vmatprep.subr.mxu0 %v45
    %89 = vmatpush1.msra.mxu0 %v44
    %90 = vmatprep.subr.mxu0 %v47
    %91 = vmatpush1.msra.mxu0 %v46
    %92 = vmatprep.subr.mxu0 %v49
    %93 = vmatpush1.msra.mxu0 %v48
    %94 = vmatprep.subr.mxu0 %v51
    %95 = vmatpush1.msra.mxu0 %v50
    %96 = vmatprep.subr.mxu0 %v53
    %97 = vmatpush1.msra.mxu0 %v52
    %98 = vmatprep.subr.mxu0 %v55
    %99 = vmatpush1.msra.mxu0 %v54
    %100 = vmatprep.subr.mxu0 %v57
    %101 = vmatpush1.msra.mxu0 %v56
    %102 = vmatprep.subr.mxu0 %v59
    %103 = vmatpush1.msra.mxu0 %v58
    %104 = vmatprep.subr.mxu0 %v61
    %105 = vmatpush1.msra.mxu0 %v60
    %106 = vmatprep.subr.mxu0 %v63
    %107 = vmatpush1.msra.mxu0 %v62
    %108 = vmatprep.subr.mxu0 %v65
    %109 = vmatpush1.msra.mxu0 %v64
    %110 = vmatprep.subr.mxu0 %v67
    %111 = vmatpush1.msra.mxu0 %v66
    %112 = vmatprep.subr.mxu0 %v69
    %113 = vmatpush1.msra.mxu0 %v68
    %114 = vmatprep.subr.mxu0 %v71
    %115 = vmatpush1.msra.mxu0 %v70
    %116 = vmatprep.subr.mxu0 %v73
    %117 = vmatpush1.msra.mxu0 %v72
    %118 = vmatprep.subr.mxu0 0.0
    %119 = vmatpush1.msra.mxu0 0.0
    %120 = vmatprep.subr.mxu0 0.0
    %121 = vmatpush1.msra.mxu0 0.0
    %122 = vmatprep.subr.mxu0 0.0
    %123 = vmatpush1.msra.mxu0 0.0
    %124 = vmatprep.subr.mxu0 0.0
    %125 = vmatpush1.msra.mxu0 0.0
    %126 = vmatprep.subr.mxu0 0.0
    %127 = vmatpush1.msra.mxu0 0.0
    %128 = vmatprep.subr.mxu0 0.0
    %129 = vmatpush1.msra.mxu0 0.0
    %130 = vmatprep.subr.mxu0 0.0
    %131 = vmatpush1.msra.mxu0 0.0
    %132 = vmatprep.subr.mxu0 0.0
    %133 = vmatpush1.msra.mxu0 0.0
    %134 = vmatprep.subr.mxu0 0.0
    %135 = vmatpush1.msra.mxu0 0.0
    %136 = vmatprep.subr.mxu0 0.0
    %137 = vmatpush1.msra.mxu0 0.0
    %138 = vmatprep.subr.mxu0 0.0
    %139 = vmatpush1.msra.mxu0 0.0
    %140 = vmatprep.subr.mxu0 0.0
    %141 = vmatpush1.msra.mxu0 0.0
    %142 = vmatprep.subr.mxu0 0.0
    %143 = vmatpush1.msra.mxu0 0.0
    %144 = vmatprep.subr.mxu0 0.0
    %145 = vmatpush1.msra.mxu0 0.0
    %146 = vmatprep.subr.mxu0 0.0
    %147 = vmatpush1.msra.mxu0 0.0
    %148 = vmatprep.subr.mxu0 0.0
    %149 = vmatpush1.msra.mxu0 0.0
    %150 = vmatprep.mubr.f32.mxu0 0.0
    %151 = vmatmul.mubr.f32.gmra.mrb[0].mxu0 %v41
    %v152 = vpop.f32.mrb[0].mxu0
    %v153 = vadd.f32 %v79, %v152
    %v154 = vpop.f32.mrb[0].mxu0
    %v155 = vadd.f32 %v83, %v154
    %156 = vdwg.mxu0
    %v157 = vmax.f32 %v153, -10.0
    %v158 = vmax.f32 %v155, -10.0
    %v159 = vmin.f32 %v157, 10.0
    %v160 = vmin.f32 %v158, 10.0
    %v161 = vld [vmem:[#allocation2] sm:$0xff]
    %v162 = vld [vmem:[#allocation2 + $0x8] sm:$0xff]
    %v163 = vld [vmem:[#allocation2 + $0x10] sm:$0xff]
    %v164 = vld [vmem:[#allocation2 + $0x18] sm:$0xff]
    %v165 = vld [vmem:[#allocation2 + $0x20] sm:$0xff]
    %v166 = vld [vmem:[#allocation2 + $0x28] sm:$0xff]
    %v167 = vld [vmem:[#allocation2 + $0x30] sm:$0xff]
    %v168 = vld [vmem:[#allocation2 + $0x38] sm:$0xff]
    %v169 = vld [vmem:[#allocation2 + $0x40] sm:$0xff]
    %v170 = vld [vmem:[#allocation2 + $0x48] sm:$0xff]
    %v171 = vld [vmem:[#allocation2 + $0x50] sm:$0xff]
    %v172 = vld [vmem:[#allocation2 + $0x58] sm:$0xff]
    %v173 = vld [vmem:[#allocation2 + $0x60] sm:$0xff]
    %v174 = vld [vmem:[#allocation2 + $0x68] sm:$0xff]
    %v175 = vld [vmem:[#allocation2 + $0x70] sm:$0xff]
    %v176 = vld [vmem:[#allocation2 + $0x78] sm:$0xff]
    %v177 = vld [vmem:[#allocation2 + $0x80] sm:$0xff]
    %v178 = vld [vmem:[#allocation2 + $0x88] sm:$0xff]
    %v179 = vld [vmem:[#allocation2 + $0x90] sm:$0xff]
    %v180 = vld [vmem:[#allocation2 + $0x98] sm:$0xff]
    %v181 = vld [vmem:[#allocation2 + $0xa0] sm:$0xff]
    %v182 = vld [vmem:[#allocation2 + $0xa8] sm:$0xff]
    %v183 = vld [vmem:[#allocation2 + $0xb0] sm:$0xff]
    %v184 = vld [vmem:[#allocation2 + $0xb8] sm:$0xff]
    %v185 = vld [vmem:[#allocation2 + $0xc0] sm:$0xff]
    %v186 = vld [vmem:[#allocation2 + $0xc8] sm:$0xff]
    %v187 = vld [vmem:[#allocation2 + $0xd0] sm:$0xff]
    %v188 = vld [vmem:[#allocation2 + $0xd8] sm:$0xff]
    %v189 = vld [vmem:[#allocation2 + $0xe0] sm:$0xff]
    %v190 = vld [vmem:[#allocation2 + $0xe8] sm:$0xff]
    %v191 = vld [vmem:[#allocation2 + $0xf0] sm:$0xff]
    %v192 = vld [vmem:[#allocation2 + $0xf8] sm:$0xff]
    %v193 = vld [vmem:[#allocation2 + $0x100] sm:$0xff]
    %v194 = vld [vmem:[#allocation2 + $0x108] sm:$0xff]
    %v195 = vld [vmem:[#allocation2 + $0x110] sm:$0xff]
    %v196 = vld [vmem:[#allocation2 + $0x118] sm:$0xff]
    %v197 = vld [vmem:[#allocation2 + $0x120] sm:$0xff]
    %v198 = vld [vmem:[#allocation2 + $0x128] sm:$0xff]
    %v199 = vld [vmem:[#allocation2 + $0x130] sm:$0xff]
    %v200 = vld [vmem:[#allocation2 + $0x138] sm:$0xff]
    %v201 = vld [vmem:[#allocation2 + $0x140] sm:$0xff]
    %v202 = vld [vmem:[#allocation2 + $0x148] sm:$0xff]
    %v203 = vld [vmem:[#allocation2 + $0x150] sm:$0xff]
    %v204 = vld [vmem:[#allocation2 + $0x158] sm:$0xff]
    %v205 = vld [vmem:[#allocation2 + $0x160] sm:$0xff]
    %v206 = vld [vmem:[#allocation2 + $0x168] sm:$0xff]
    %v207 = vld [vmem:[#allocation2 + $0x170] sm:$0xff]
    %v208 = vld [vmem:[#allocation2 + $0x178] sm:$0xff]
    %v209 = vld [vmem:[#allocation2 + $0x180] sm:$0xff]
    %v210 = vld [vmem:[#allocation2 + $0x188] sm:$0xff]
    %v211 = vld [vmem:[#allocation2 + $0x190] sm:$0xff]
    %v212 = vld [vmem:[#allocation2 + $0x198] sm:$0xff]
    %v213 = vld [vmem:[#allocation2 + $0x1a0] sm:$0xff]
    %v214 = vld [vmem:[#allocation2 + $0x1a8] sm:$0xff]
    %v215 = vld [vmem:[#allocation2 + $0x1b0] sm:$0xff]
    %v216 = vld [vmem:[#allocation2 + $0x1b8] sm:$0xff]
    %v217 = vld [vmem:[#allocation2 + $0x1c0] sm:$0xff]
    %v218 = vld [vmem:[#allocation2 + $0x1c8] sm:$0xff]
    %v219 = vld [vmem:[#allocation2 + $0x1d0] sm:$0xff]
    %v220 = vld [vmem:[#allocation2 + $0x1d8] sm:$0xff]
    %v221 = vld [vmem:[#allocation2 + $0x1e0] sm:$0xff]
    %v222 = vld [vmem:[#allocation2 + $0x1e8] sm:$0xff]
    %v223 = vld [vmem:[#allocation2 + $0x1f0] sm:$0xff]
    %v224 = vld [vmem:[#allocation2 + $0x1f8] sm:$0xff]
    %v225 = vld [vmem:[%s4] sm:$0x3]
    %v227 = vlaneseq
    %v228 = vshrl.u32 %v227, 7
    %v229 = vsub.s32 0, %v228
    %v230 = vrot.slane %v225, %v229
    %v231 = vlaneseq
    %v232 = vshrl.u32 %v231, 7
    %v233 = vsub.s32 1, %v232
    %v234 = vrot.slane %v225, %v233
    %237 = vmatprep.subr.mxu0 %v162
    %238 = vmatpush1.msra.mxu0 %v161
    %239 = vmatprep.subr.mxu0 %v164
    %240 = vmatpush1.msra.mxu0 %v163
    %241 = vmatprep.subr.mxu0 %v166
    %242 = vmatpush1.msra.mxu0 %v165
    %243 = vmatprep.subr.mxu0 %v168
    %244 = vmatpush1.msra.mxu0 %v167
    %245 = vmatprep.subr.mxu0 %v170
    %246 = vmatpush1.msra.mxu0 %v169
    %247 = vmatprep.subr.mxu0 %v172
    %248 = vmatpush1.msra.mxu0 %v171
    %249 = vmatprep.subr.mxu0 %v174
    %250 = vmatpush1.msra.mxu0 %v173
    %251 = vmatprep.subr.mxu0 %v176
    %252 = vmatpush1.msra.mxu0 %v175
    %253 = vmatprep.subr.mxu0 %v178
    %254 = vmatpush1.msra.mxu0 %v177
    %255 = vmatprep.subr.mxu0 %v180
    %256 = vmatpush1.msra.mxu0 %v179
    %257 = vmatprep.subr.mxu0 %v182
    %258 = vmatpush1.msra.mxu0 %v181
    %259 = vmatprep.subr.mxu0 %v184
    %260 = vmatpush1.msra.mxu0 %v183
    %261 = vmatprep.subr.mxu0 %v186
    %262 = vmatpush1.msra.mxu0 %v185
    %263 = vmatprep.subr.mxu0 %v188
    %264 = vmatpush1.msra.mxu0 %v187
    %265 = vmatprep.subr.mxu0 %v190
    %266 = vmatpush1.msra.mxu0 %v189
    %267 = vmatprep.subr.mxu0 %v192
    %268 = vmatpush1.msra.mxu0 %v191
    %269 = vmatprep.subr.mxu0 %v194
    %270 = vmatpush1.msra.mxu0 %v193
    %271 = vmatprep.subr.mxu0 %v196
    %272 = vmatpush1.msra.mxu0 %v195
    %273 = vmatprep.subr.mxu0 %v198
    %274 = vmatpush1.msra.mxu0 %v197
    %275 = vmatprep.subr.mxu0 %v200
    %276 = vmatpush1.msra.mxu0 %v199
    %277 = vmatprep.subr.mxu0 %v202
    %278 = vmatpush1.msra.mxu0 %v201
    %279 = vmatprep.subr.mxu0 %v204
    %280 = vmatpush1.msra.mxu0 %v203
    %281 = vmatprep.subr.mxu0 %v206
    %282 = vmatpush1.msra.mxu0 %v205
    %283 = vmatprep.subr.mxu0 %v208
    %284 = vmatpush1.msra.mxu0 %v207
    %285 = vmatprep.subr.mxu0 %v210
    %286 = vmatpush1.msra.mxu0 %v209
    %287 = vmatprep.subr.mxu0 %v212
    %288 = vmatpush1.msra.mxu0 %v211
    %289 = vmatprep.subr.mxu0 %v214
    %290 = vmatpush1.msra.mxu0 %v213
    %291 = vmatprep.subr.mxu0 %v216
    %292 = vmatpush1.msra.mxu0 %v215
    %293 = vmatprep.subr.mxu0 %v218
    %294 = vmatpush1.msra.mxu0 %v217
    %295 = vmatprep.subr.mxu0 %v220
    %296 = vmatpush1.msra.mxu0 %v219
    %297 = vmatprep.subr.mxu0 %v222
    %298 = vmatpush1.msra.mxu0 %v221
    %299 = vmatprep.subr.mxu0 %v224
    %300 = vmatpush1.msra.mxu0 %v223
    %301 = vmatprep.mubr.f32.mxu0 %v160
    %302 = vmatmul.mubr.f32.gmra.mrb[0].mxu0 %v159
    %v303 = vpop.f32.mrb[0].mxu0
    %v304 = vadd.f32 %v230, %v303
    %v305 = vpop.f32.mrb[0].mxu0
    %v306 = vadd.f32 %v234, %v305
    %307 = vdwg.mxu0
    %v308 = vmax.f32 %v304, 0.0
    %v309 = vmax.f32 %v306, 0.0
    %v310 = vld [vmem:[%s5] sm:$0xff]
    %v311 = vld [vmem:[%s5 + $0x8] sm:$0xff]
    %v312 = vld [vmem:[%s5 + $0x10] sm:$0xff]
    %v313 = vld [vmem:[%s5 + $0x18] sm:$0xff]
    %v314 = vld [vmem:[%s5 + $0x20] sm:$0xff]
    %v315 = vld [vmem:[%s5 + $0x28] sm:$0xff]
    %v316 = vld [vmem:[%s5 + $0x30] sm:$0xff]
    %v317 = vld [vmem:[%s5 + $0x38] sm:$0xff]
    %v318 = vld [vmem:[%s5 + $0x40] sm:$0xff]
    %v319 = vld [vmem:[%s5 + $0x48] sm:$0xff]
    %v320 = vld [vmem:[%s5 + $0x50] sm:$0xff]
    %v321 = vld [vmem:[%s5 + $0x58] sm:$0xff]
    %v322 = vld [vmem:[%s5 + $0x60] sm:$0xff]
    %v323 = vld [vmem:[%s5 + $0x68] sm:$0xff]
    %v324 = vld [vmem:[%s5 + $0x70] sm:$0xff]
    %v325 = vld [vmem:[%s5 + $0x78] sm:$0xff]
    %v326 = vld [vmem:[%s5 + $0x80] sm:$0xff]
    %v327 = vld [vmem:[%s5 + $0x88] sm:$0xff]
    %v328 = vld [vmem:[%s5 + $0x90] sm:$0xff]
    %v329 = vld [vmem:[%s5 + $0x98] sm:$0xff]
    %v330 = vld [vmem:[%s5 + $0xa0] sm:$0xff]
    %v331 = vld [vmem:[%s5 + $0xa8] sm:$0xff]
    %v332 = vld [vmem:[%s5 + $0xb0] sm:$0xff]
    %v333 = vld [vmem:[%s5 + $0xb8] sm:$0xff]
    %v334 = vld [vmem:[%s5 + $0xc0] sm:$0xff]
    %v335 = vld [vmem:[%s5 + $0xc8] sm:$0xff]
    %v336 = vld [vmem:[%s5 + $0xd0] sm:$0xff]
    %v337 = vld [vmem:[%s5 + $0xd8] sm:$0xff]
    %v338 = vld [vmem:[%s5 + $0xe0] sm:$0xff]
    %v339 = vld [vmem:[%s5 + $0xe8] sm:$0xff]
    %v340 = vld [vmem:[%s5 + $0xf0] sm:$0xff]
    %v341 = vld [vmem:[%s5 + $0xf8] sm:$0xff]
    %v342 = vld [vmem:[%s6] sm:$0x1]
    %v344 = vlaneseq
    %v345 = vshrl.u32 %v344, 7
    %v346 = vsub.s32 0, %v345
    %v347 = vrot.slane %v342, %v346
    %349 = vmatprep.subr.mxu0 0.0
    %350 = vmatpush1.msra.mxu0 %v310
    %351 = vmatprep.subr.mxu0 0.0
    %352 = vmatpush1.msra.mxu0 %v311
    %353 = vmatprep.subr.mxu0 0.0
    %354 = vmatpush1.msra.mxu0 %v312
    %355 = vmatprep.subr.mxu0 0.0
    %356 = vmatpush1.msra.mxu0 %v313
    %357 = vmatprep.subr.mxu0 0.0
    %358 = vmatpush1.msra.mxu0 %v314
    %359 = vmatprep.subr.mxu0 0.0
    %360 = vmatpush1.msra.mxu0 %v315
    %361 = vmatprep.subr.mxu0 0.0
    %362 = vmatpush1.msra.mxu0 %v316
    %363 = vmatprep.subr.mxu0 0.0
    %364 = vmatpush1.msra.mxu0 %v317
    %365 = vmatprep.subr.mxu0 0.0
    %366 = vmatpush1.msra.mxu0 %v318
    %367 = vmatprep.subr.mxu0 0.0
    %368 = vmatpush1.msra.mxu0 %v319
    %369 = vmatprep.subr.mxu0 0.0
    %370 = vmatpush1.msra.mxu0 %v320
    %371 = vmatprep.subr.mxu0 0.0
    %372 = vmatpush1.msra.mxu0 %v321
    %373 = vmatprep.subr.mxu0 0.0
    %374 = vmatpush1.msra.mxu0 %v322
    %375 = vmatprep.subr.mxu0 0.0
    %376 = vmatpush1.msra.mxu0 %v323
    %377 = vmatprep.subr.mxu0 0.0
    %378 = vmatpush1.msra.mxu0 %v324
    %379 = vmatprep.subr.mxu0 0.0
    %380 = vmatpush1.msra.mxu0 %v325
    %381 = vmatprep.subr.mxu0 0.0
    %382 = vmatpush1.msra.mxu0 %v326
    %383 = vmatprep.subr.mxu0 0.0
    %384 = vmatpush1.msra.mxu0 %v327
    %385 = vmatprep.subr.mxu0 0.0
    %386 = vmatpush1.msra.mxu0 %v328
    %387 = vmatprep.subr.mxu0 0.0
    %388 = vmatpush1.msra.mxu0 %v329
    %389 = vmatprep.subr.mxu0 0.0
    %390 = vmatpush1.msra.mxu0 %v330
    %391 = vmatprep.subr.mxu0 0.0
    %392 = vmatpush1.msra.mxu0 %v331
    %393 = vmatprep.subr.mxu0 0.0
    %394 = vmatpush1.msra.mxu0 %v332
    %395 = vmatprep.subr.mxu0 0.0
    %396 = vmatpush1.msra.mxu0 %v333
    %397 = vmatprep.subr.mxu0 0.0
    %398 = vmatpush1.msra.mxu0 %v334
    %399 = vmatprep.subr.mxu0 0.0
    %400 = vmatpush1.msra.mxu0 %v335
    %401 = vmatprep.subr.mxu0 0.0
    %402 = vmatpush1.msra.mxu0 %v336
    %403 = vmatprep.subr.mxu0 0.0
    %404 = vmatpush1.msra.mxu0 %v337
    %405 = vmatprep.subr.mxu0 0.0
    %406 = vmatpush1.msra.mxu0 %v338
    %407 = vmatprep.subr.mxu0 0.0
    %408 = vmatpush1.msra.mxu0 %v339
    %409 = vmatprep.subr.mxu0 0.0
    %410 = vmatpush1.msra.mxu0 %v340
    %411 = vmatprep.subr.mxu0 0.0
    %412 = vmatpush1.msra.mxu0 %v341
    %413 = vmatprep.mubr.f32.mxu0 %v309
    %414 = vmatmul.mubr.f32.gmra.mrb[0].mxu0 %v308
    %v415 = vpop.f32.mrb[0].mxu0
    %v416 = vadd.f32 %v347, %v415
    %v417 = vpop.f32.mrb[0].mxu0
    %418 = vdwg.mxu0
    %vm419 = vcmask 523264
    %420 = vst.msk [vmem:[#allocation5] sm:$0xff] %vm419, %v416
    // Predicated region
    $region34: #{tpu_custom_call.1} parent=1 // pred_check
      _
    $region35: #{tpu_custom_call.1} parent=1 // pred_check_branch
      %422 = sbr.rel (0) target = $region37
    $region36: #{tpu_custom_call.1} parent=1 // pred_region
      %s424 = ssub.s32 128, 128
      %425 = vsyncadd [#allocation4], %s424
      %s427 = sshll.u32 [#allocation5], 4
      %s428 = int_to_ptr.vmem [resolvable:$true] %s427
      %430 = dma.vmem_to_hbm [thread:$0]  %s428, 128, %s7, [#allocation4]
    $region37: #{tpu_custom_call.1} parent=1 // pred_fallthru
      _
    // Predicated region
    $region38: #{tpu_custom_call.1} parent=1 // pred_check
      _
    $region39: #{tpu_custom_call.1} parent=1 // pred_check_branch
      %432 = sbr.rel (0) target = $region41
    $region40: #{tpu_custom_call.1} parent=1 // pred_region
      %433 = dma.done [#allocation4], 128
    $region41: #{tpu_custom_call.1} parent=1 // pred_fallthru
      _
    %434 = vsyncpa [#allocation3], 1
    %435 = vsyncpa [#allocation4], 1

</llo_original>
